<compile_context>
chip_gen: v7x
topology: tpu7x:2x2x1
jax: 0.10.0
libtpu: 0.0.40
codegen_flags: <defaults>
</compile_context>

<pallas_src>
import numpy as np
import jax
import jax.numpy as jnp
from jax.experimental import pallas as pl
from jax.experimental.pallas import tpu as pltpu


def _round_up(a, b):
    return (a + b - 1) // b * b


def equalized_linear(x, weight, bias=None, lr_mul=1.0, *,
                     compute_dtype=jnp.bfloat16,
                     block_m=512, block_n=512, block_k=2048):
    """x: [M, in_dim]  weight: [out_dim, in_dim]  bias: [out_dim] -> [M, out_dim]."""
    M, K = x.shape
    N, K2 = weight.shape
    assert K == K2, (x.shape, weight.shape)
    out_dtype = x.dtype

    wf = float(np.sqrt(2.0 / K) * lr_mul)   # weight factor -> kernel epilogue
    bf = float(lr_mul)                      # bias factor   -> folded into bias below

    # ---- padded problem sizes (M: sublane 8, N/K: lane 128; lane-dense out) ----
    Mp = _round_up(M, 8)
    Np = _round_up(N, 128)
    Kp = _round_up(K, 128)

    # ---- tile selection: full extent when it fits, aligned tile otherwise -----
    if Mp > block_m:
        tm = block_m
        Mp = _round_up(Mp, tm)
    else:
        tm = Mp
    if Np > block_n:
        tn = block_n
        Np = _round_up(Np, tn)
    else:
        tn = Np
    if Kp > block_k:
        tk = block_k
        Kp = _round_up(Kp, tk)
    else:
        tk = Kp

    # v7x has 2 TensorCores: make sure the "parallel" (i, j) grid has >= 2 tiles
    # when the problem is big enough so both cores get work (no-op on v5e/v6e).
    if Mp // tm == 1 and Np // tn == 1:
        if Np >= 256 and (Np // 2) % 128 == 0:
            tn = Np // 2
        elif Mp >= 16 and (Mp // 2) % 8 == 0:
            tm = Mp // 2

    grid = (Mp // tm, Np // tn, Kp // tk)

    # ---- operand prep: one fused XLA pass each (cast [+ transpose] [+ pad]) ---
    xp = x.astype(compute_dtype)
    if (Mp, Kp) != (M, K):
        xp = jnp.pad(xp, ((0, Mp - M), (0, Kp - K)))
    # W^T [K, N] so the kernel runs a plain k-major contraction on the MXU.
    wp = weight.T.astype(compute_dtype)
    if (Kp, Np) != (K, N):
        wp = jnp.pad(wp, ((0, Kp - K), (0, Np - N)))
    if bias is None:
        b2 = jnp.zeros((1, Np), jnp.float32)
    else:
        b2 = (bias.astype(jnp.float32) * bf).reshape(1, N)
        if Np != N:
            b2 = jnp.pad(b2, ((0, 0), (0, Np - N)))

    out_is_f32 = (out_dtype == jnp.float32)

    if out_is_f32:
        # f32 output: the resident output block IS the accumulator.
        def kernel(x_ref, w_ref, b_ref, o_ref):
            @pl.when(pl.program_id(2) == 0)
            def _init():
                o_ref[...] = jnp.zeros_like(o_ref)

            o_ref[...] += jnp.dot(x_ref[...], w_ref[...],
                                  preferred_element_type=jnp.float32)

            @pl.when(pl.program_id(2) == pl.num_programs(2) - 1)
            def _fin():
                o_ref[...] = o_ref[...] * wf + b_ref[...]

        scratch_shapes = []
    else:
        # Narrow output dtype: keep a float32 scratch accumulator.
        def kernel(x_ref, w_ref, b_ref, o_ref, acc_ref):
            @pl.when(pl.program_id(2) == 0)
            def _init():
                acc_ref[...] = jnp.zeros_like(acc_ref)

            acc_ref[...] += jnp.dot(x_ref[...], w_ref[...],
                                    preferred_element_type=jnp.float32)

            @pl.when(pl.program_id(2) == pl.num_programs(2) - 1)
            def _fin():
                o_ref[...] = (acc_ref[...] * wf + b_ref[...]).astype(o_ref.dtype)

        scratch_shapes = [pltpu.VMEM((tm, tn), jnp.float32)]

    cost = pl.CostEstimate(
        flops=2 * M * N * K,
        bytes_accessed=int(M * K * np.dtype(compute_dtype).itemsize
                           + N * K * np.dtype(compute_dtype).itemsize
                           + N * 4
                           + M * N * np.dtype(out_dtype).itemsize),
        transcendentals=0)

    out = pl.pallas_call(
        kernel,
        out_shape=jax.ShapeDtypeStruct((Mp, Np), out_dtype),
        grid_spec=pltpu.PrefetchScalarGridSpec(
            num_scalar_prefetch=0,
            grid=grid,
            in_specs=[
                pl.BlockSpec((tm, tk), lambda i, j, k: (i, k)),   # x        [M, K]
                pl.BlockSpec((tk, tn), lambda i, j, k: (k, j)),   # W^T      [K, N]
                pl.BlockSpec((1, tn), lambda i, j, k: (0, j)),    # bias*bf  [1, N]
            ],
            out_specs=pl.BlockSpec((tm, tn), lambda i, j, k: (i, j)),
            scratch_shapes=scratch_shapes,
        ),
        compiler_params=pltpu.CompilerParams(
            dimension_semantics=("parallel", "parallel", "arbitrary"),
            vmem_limit_bytes=48 * 1024 * 1024),
        cost_estimate=cost,
    )(xp, wp, b2)

    if (Mp, Np) != (M, N):
        out = out[:M, :N]
    return out


def _reference(x, w, b, lr_mul, quantize=False):
    """Numpy reference of the PyTorch forward (optionally with bf16-rounded operands)."""
    x = np.asarray(x, np.float32)
    w = np.asarray(w, np.float32)
    if quantize:
        x = np.asarray(jnp.asarray(x).astype(jnp.bfloat16).astype(jnp.float32))
        w = np.asarray(jnp.asarray(w).astype(jnp.bfloat16).astype(jnp.float32))
    wf = np.sqrt(2.0 / w.shape[1]) * lr_mul
    return x @ (w * wf).T + np.asarray(b, np.float32) * lr_mul


if __name__ == "__main__":
    key = jax.random.PRNGKey(0)
    k1, k2, k3, k4 = jax.random.split(key, 4)

    # --- small, module-consistent shapes (batch=2, in_dim=32, out_dim=64) -----
    batch, in_dim, out_dim, lr_mul = 2, 32, 64, 1.0
    x = jax.random.normal(k1, (batch, in_dim), jnp.float32)
    weight = jax.random.normal(k2, (out_dim, in_dim), jnp.float32) / lr_mul
    bias = jnp.zeros((out_dim,), jnp.float32)          # bias_value = 0.0

    y = equalized_linear(x, weight, bias, lr_mul)
    jax.block_until_ready(y)
    assert y.shape == (batch, out_dim), y.shape
    assert y.dtype == x.dtype
    # Exact check against the bf16-rounded-operand reference (what the MXU computes).
    assert np.allclose(np.asarray(y), _reference(x, weight, bias, lr_mul, quantize=True),
                       rtol=1e-3, atol=1e-3)
    # Loose check against the full-precision reference (bf16 operand rounding).
    assert np.allclose(np.asarray(y), _reference(x, weight, bias, lr_mul),
                       rtol=3e-2, atol=3e-2)

    # --- larger shapes exercising tiling, padding and the megacore split ------
    M, K, N, lr2 = 512, 1024, 384, 0.5
    xb = jax.random.normal(k3, (M, K), jnp.float32)
    wb = jax.random.normal(k4, (N, K), jnp.float32) / lr2
    bb = jnp.full((N,), 0.1, jnp.float32)

    yb = equalized_linear(xb, wb, bb, lr2)
    jax.block_until_ready(yb)
    assert yb.shape == (M, N), yb.shape
    assert bool(jnp.all(jnp.isfinite(yb)))
    assert np.allclose(np.asarray(yb), _reference(xb, wb, bb, lr2, quantize=True),
                       rtol=1e-3, atol=1e-3)
    assert np.allclose(np.asarray(yb), _reference(xb, wb, bb, lr2),
                       rtol=6e-2, atol=6e-2)

    print("KERNEL_OK")
</pallas_src>

<mosaic_0001>
module attributes {stable_mosaic.version = 11 : i64} {
  func.func @kernel(%arg0: i32, %arg1: i32, %arg2: i32, %arg3: memref<8x128xbf16, #tpu.memory_space<vmem>>, %arg4: memref<128x128xbf16, #tpu.memory_space<vmem>>, %arg5: memref<1x128xf32, #tpu.memory_space<vmem>>, %arg6: memref<8x128xf32, #tpu.memory_space<vmem>>) attributes {dimension_semantics = [#tpu.dimension_semantics<parallel>, #tpu.dimension_semantics<parallel>, #tpu.dimension_semantics<arbitrary>], iteration_bounds = array<i64: 1, 1, 1>, scalar_prefetch = 0 : i64, scratch_operands = 0 : i64, tpu.core_type = #tpu.core_type<tc>, window_params = [{transform_indices = @transform_0, window_bounds = array<i64: 8, 128>}, {transform_indices = @transform_1, window_bounds = array<i64: 128, 128>}, {transform_indices = @transform_2, window_bounds = array<i64: 1, 128>}, {transform_indices = @transform_3, window_bounds = array<i64: 8, 128>}]} {
    %c0_i32 = arith.constant 0 : i32
    %0 = arith.cmpi eq, %arg2, %c0_i32 : i32
    %1 = arith.extui %0 : i1 to i32
    %c0_i32_0 = arith.constant 0 : i32
    %2 = arith.cmpi ne, %1, %c0_i32_0 : i32
    scf.if %2 {
      %cst_10 = arith.constant 0.000000e+00 : f32
      %12 = vector.broadcast %cst_10 : f32 to vector<8x128xf32>
      %c0_11 = arith.constant 0 : index
      %c0_12 = arith.constant 0 : index
      %13 = vector.load %arg6[%c0_11, %c0_12] : memref<8x128xf32, #tpu.memory_space<vmem>>, vector<8x128xf32>
      tpu.vector_store %arg6[%c0_11, %c0_12], %12 {strides = array<i32>} : memref<8x128xf32, #tpu.memory_space<vmem>>, vector<8x128xf32>,
    } else {
    }
    %c0 = arith.constant 0 : index
    %c0_1 = arith.constant 0 : index
    %3 = vector.load %arg6[%c0, %c0_1] : memref<8x128xf32, #tpu.memory_space<vmem>>, vector<8x128xf32>
    %c0_2 = arith.constant 0 : index
    %c0_3 = arith.constant 0 : index
    %4 = vector.load %arg3[%c0_2, %c0_3] : memref<8x128xbf16, #tpu.memory_space<vmem>>, vector<8x128xbf16>
    %c0_4 = arith.constant 0 : index
    %c0_5 = arith.constant 0 : index
    %5 = vector.load %arg4[%c0_4, %c0_5] : memref<128x128xbf16, #tpu.memory_space<vmem>>, vector<128x128xbf16>
    %cst = arith.constant dense<0.000000e+00> : vector<8x128xf32>
    %6 = tpu.matmul %4, %5, %cst {dimension_numbers = #tpu.dot_dimension_numbers<[1], [0], [0], [1], [0, 0, 1, 1], [], []>} : vector<8x128xbf16>, vector<128x128xbf16>, vector<8x128xf32> -> vector<8x128xf32>
    %7 = arith.addf %3, %6 : vector<8x128xf32>
    %c0_6 = arith.constant 0 : index
    %c0_7 = arith.constant 0 : index
    %8 = vector.load %arg6[%c0_6, %c0_7] : memref<8x128xf32, #tpu.memory_space<vmem>>, vector<8x128xf32>
    tpu.vector_store %arg6[%c0_6, %c0_7], %7 {strides = array<i32>} : memref<8x128xf32, #tpu.memory_space<vmem>>, vector<8x128xf32>,
    %c0_i32_8 = arith.constant 0 : i32
    %9 = arith.cmpi eq, %arg2, %c0_i32_8 : i32
    %10 = arith.extui %9 : i1 to i32
    %c0_i32_9 = arith.constant 0 : i32
    %11 = arith.cmpi ne, %10, %c0_i32_9 : i32
    scf.if %11 {
      %c0_10 = arith.constant 0 : index
      %c0_11 = arith.constant 0 : index
      %12 = vector.load %arg6[%c0_10, %c0_11] : memref<8x128xf32, #tpu.memory_space<vmem>>, vector<8x128xf32>
      %cst_12 = arith.constant 2.500000e-01 : f32
      %13 = vector.broadcast %cst_12 : f32 to vector<8x128xf32>
      %14 = arith.mulf %12, %13 : vector<8x128xf32>
      %c0_13 = arith.constant 0 : index
      %c0_14 = arith.constant 0 : index
      %15 = vector.load %arg5[%c0_13, %c0_14] : memref<1x128xf32, #tpu.memory_space<vmem>>, vector<1x128xf32>
      %16 = vector.broadcast %15 : vector<1x128xf32> to vector<8x128xf32>
      %17 = arith.addf %14, %16 : vector<8x128xf32>
      %c0_15 = arith.constant 0 : index
      %c0_16 = arith.constant 0 : index
      %18 = vector.load %arg6[%c0_15, %c0_16] : memref<8x128xf32, #tpu.memory_space<vmem>>, vector<8x128xf32>
      tpu.vector_store %arg6[%c0_15, %c0_16], %17 {strides = array<i32>} : memref<8x128xf32, #tpu.memory_space<vmem>>, vector<8x128xf32>,
    } else {
    }
    return
  }
  func.func @transform_0(%arg0: i32, %arg1: i32, %arg2: i32) -> (i32, i32) {
    %c0_i32 = arith.constant 0 : i32
    return %arg0, %arg2 : i32, i32
  }
  func.func @transform_1(%arg0: i32, %arg1: i32, %arg2: i32) -> (i32, i32) {
    %c0_i32 = arith.constant 0 : i32
    return %arg2, %arg1 : i32, i32
  }
  func.func @transform_2(%arg0: i32, %arg1: i32, %arg2: i32) -> (i32, i32) {
    %c0_i32 = arith.constant 0 : i32
    %c0_i32_0 = arith.constant 0 : i32
    return %c0_i32, %arg1 : i32, i32
  }
  func.func @transform_3(%arg0: i32, %arg1: i32, %arg2: i32) -> (i32, i32) {
    %c0_i32 = arith.constant 0 : i32
    return %arg0, %arg1 : i32, i32
  }
}

</mosaic_0001>

<llo_original>
// kernel: tpu_custom_call.1
$region0: #{tpu_custom_call.1}
  #allocation0 [shape = 'u32[]', space=smem, size = 0x4, offset = 0x4, fixed_abs, tag = 'smem constant byte address 0x4 - core index']
  #allocation1 [shape = 'u32[144,128]{1,0:T(1,128)}', space=vmem, size = 0x12000, scoped, tag = 'internal scratch']
  %s0 = inlined_call_operand.hbm [shape: bf16[8,128], index: 0, kind: input, shape index: {}]
  %s1 = inlined_call_operand.hbm [shape: bf16[128,128], index: 1, kind: input, shape index: {}]
  %s2 = inlined_call_operand.vmem [shape: f32[1,128], index: 2, kind: input, shape index: {}]
  %s3 = inlined_call_operand.hbm [shape: f32[8,128], index: 3, kind: output, shape index: {}]
  %s4 = sld [smem:[#allocation0]]
  $region38: #{tpu_custom_call.1} parent=0
    _
  %s6 = ssub.s32 1, %s4
  %s7 = scalar_select 0, %s6, %s4
  $region1: #{tpu_custom_call.1} parent=0
    #allocation2 [shape = 'u8[2048]{0}', space=vmem, size = 0x800, scoped, tag = 'input window, operand 0, single buffered']
    #allocation3 [shape = 's32[1]{0}', space=sflag, size = 0x4, scoped, tag = 'scoped memory for tpu_custom_call.1']
    #allocation4 [shape = 's32[1]{0}', space=sflag, size = 0x4, scoped, tag = 'scoped memory for tpu_custom_call.1']
    #allocation5 [shape = 'u8[32768]{0}', space=vmem, size = 0x8000, scoped, tag = 'input window, operand 1, single buffered']
    #allocation6 [shape = 's32[1]{0}', space=sflag, size = 0x4, scoped, tag = 'scoped memory for tpu_custom_call.1']
    #allocation7 [shape = 'u8[4096]{0}', space=vmem, size = 0x1000, scoped, tag = 'output window, operand 0, single buffered']
    %8 = vsyncpa [#allocation3], 0
    %9 = vsyncpa [#allocation6], 0
    %10 = vsyncpa [#allocation4], 0
    // Predicated region
    $region2: #{tpu_custom_call.1} parent=1 // pred_check
      _
    $region3: #{tpu_custom_call.1} parent=1 // pred_check_branch
      %12 = sbr.rel (0) target = $region5
    $region4: #{tpu_custom_call.1} parent=1 // pred_region
      %s14 = ssub.s32 64, 64
      %15 = vsyncadd [#allocation3], %s14
      %s17 = sshll.u32 [#allocation2], 4
      %s18 = int_to_ptr.vmem [resolvable:$true] %s17
      %20 = dma.hbm_to_vmem [thread:$0]  %s0, 64, %s18, [#allocation3]
    $region5: #{tpu_custom_call.1} parent=1 // pred_fallthru
      _
    // Predicated region
    $region6: #{tpu_custom_call.1} parent=1 // pred_check
      _
    $region7: #{tpu_custom_call.1} parent=1 // pred_check_branch
      %22 = sbr.rel (0) target = $region9
    $region8: #{tpu_custom_call.1} parent=1 // pred_region
      %s24 = ssub.s32 1024, 1024
      %25 = vsyncadd [#allocation6], %s24
      %s26 = sshll.u32 [#allocation5], 4
      %s27 = int_to_ptr.vmem [resolvable:$true] %s26
      %32 = dma.hbm_to_vmem [thread:$0]  %s1, 1024, %s27, [#allocation6], 64, 64, 4
    $region9: #{tpu_custom_call.1} parent=1 // pred_fallthru
      _
    // Predicated region
    $region10: #{tpu_custom_call.1} parent=1 // pred_check
      _
    $region11: #{tpu_custom_call.1} parent=1 // pred_check_branch
      %34 = sbr.rel (0) target = $region13
    $region12: #{tpu_custom_call.1} parent=1 // pred_region
      _
    $region13: #{tpu_custom_call.1} parent=1 // pred_fallthru
      _
    // Predicated region
    $region14: #{tpu_custom_call.1} parent=1 // pred_check
      _
    $region15: #{tpu_custom_call.1} parent=1 // pred_check_branch
      %36 = sbr.rel (0) target = $region17
    $region16: #{tpu_custom_call.1} parent=1 // pred_region
      %37 = dma.done [#allocation3], 64
    $region17: #{tpu_custom_call.1} parent=1 // pred_fallthru
      _
    // Predicated region
    $region18: #{tpu_custom_call.1} parent=1 // pred_check
      _
    $region19: #{tpu_custom_call.1} parent=1 // pred_check_branch
      %39 = sbr.rel (0) target = $region21
    $region20: #{tpu_custom_call.1} parent=1 // pred_region
      %40 = dma.done [#allocation6], 1024
    $region21: #{tpu_custom_call.1} parent=1 // pred_fallthru
      _
    %p42 = scmp.eq.s32.totalorder 0, 0
    // Predicated region
    $region22: #{tpu_custom_call.1} parent=1 // pred_check
      %p43 = pneg %p42
    $region23: #{tpu_custom_call.1} parent=1 // pred_check_branch
      %45 = sbr.rel (%p43) target = $region25
    $region24: #{tpu_custom_call.1} parent=1 // pred_region
      %46 = vst [vmem:[#allocation7] sm:$0xff] 0.0
    $region25: #{tpu_custom_call.1} parent=1 // pred_fallthru
      _
    %v47 = vld [vmem:[#allocation7] sm:$0xff]
    %v48 = vld [vmem:[#allocation2] sm:$0xf]
    %v49 = vld [vmem:[#allocation5] sm:$0xf]
    %v50 = vld [vmem:[#allocation5 + $0x4] sm:$0xf]
    %v51 = vld [vmem:[#allocation5 + $0x8] sm:$0xf]
    %v52 = vld [vmem:[#allocation5 + $0xc] sm:$0xf]
    %v53 = vld [vmem:[#allocation5 + $0x10] sm:$0xf]
    %v54 = vld [vmem:[#allocation5 + $0x14] sm:$0xf]
    %v55 = vld [vmem:[#allocation5 + $0x18] sm:$0xf]
    %v56 = vld [vmem:[#allocation5 + $0x1c] sm:$0xf]
    %v57 = vld [vmem:[#allocation5 + $0x20] sm:$0xf]
    %v58 = vld [vmem:[#allocation5 + $0x24] sm:$0xf]
    %v59 = vld [vmem:[#allocation5 + $0x28] sm:$0xf]
    %v60 = vld [vmem:[#allocation5 + $0x2c] sm:$0xf]
    %v61 = vld [vmem:[#allocation5 + $0x30] sm:$0xf]
    %v62 = vld [vmem:[#allocation5 + $0x34] sm:$0xf]
    %v63 = vld [vmem:[#allocation5 + $0x38] sm:$0xf]
    %v64 = vld [vmem:[#allocation5 + $0x3c] sm:$0xf]
    %v81 = vunpack.c.l.b16 %v49
    %v82 = vunpack.c.l.b16 %v50
    %v83 = vunpack.c.l.b16 %v51
    %v84 = vunpack.c.l.b16 %v52
    %v85 = vunpack.c.l.b16 %v53
    %v86 = vunpack.c.l.b16 %v54
    %v87 = vunpack.c.l.b16 %v55
    %v88 = vunpack.c.l.b16 %v56
    %v89 = vunpack.c.l.b16 %v57
    %v90 = vunpack.c.l.b16 %v58
    %v91 = vunpack.c.l.b16 %v59
    %v92 = vunpack.c.l.b16 %v60
    %v93 = vunpack.c.l.b16 %v61
    %v94 = vunpack.c.l.b16 %v62
    %v95 = vunpack.c.l.b16 %v63
    %v96 = vunpack.c.l.b16 %v64
    %v97 = vpack.c.b16 %v82, %v81
    %v98 = vpack.c.b16 %v84, %v83
    %v99 = vpack.c.b16 %v86, %v85
    %v100 = vpack.c.b16 %v88, %v87
    %v101 = vpack.c.b16 %v90, %v89
    %v102 = vpack.c.b16 %v92, %v91
    %v103 = vpack.c.b16 %v94, %v93
    %v104 = vpack.c.b16 %v96, %v95
    %113 = vmatprep.subr.bf16.mxu0 0
    %114 = vmatpush1.bf16.msra.mxu0 %v97
    %115 = vmatprep.subr.bf16.mxu0 0
    %116 = vmatpush1.bf16.msra.mxu0 %v98
    %117 = vmatprep.subr.bf16.mxu0 0
    %118 = vmatpush1.bf16.msra.mxu0 %v99
    %119 = vmatprep.subr.bf16.mxu0 0
    %120 = vmatpush1.bf16.msra.mxu0 %v100
    %121 = vmatprep.subr.bf16.mxu0 0
    %122 = vmatpush1.bf16.msra.mxu0 %v101
    %123 = vmatprep.subr.bf16.mxu0 0
    %124 = vmatpush1.bf16.msra.mxu0 %v102
    %125 = vmatprep.subr.bf16.mxu0 0
    %126 = vmatpush1.bf16.msra.mxu0 %v103
    %127 = vmatprep.subr.bf16.mxu0 0
    %128 = vmatpush1.bf16.msra.mxu0 %v104
    %129 = vmatprep.subr.bf16.mxu0 0
    %130 = vmatpush1.bf16.msra.mxu0 0
    %131 = vmatprep.subr.bf16.mxu0 0
    %132 = vmatpush1.bf16.msra.mxu0 0
    %133 = vmatprep.subr.bf16.mxu0 0
    %134 = vmatpush1.bf16.msra.mxu0 0
    %135 = vmatprep.subr.bf16.mxu0 0
    %136 = vmatpush1.bf16.msra.mxu0 0
    %137 = vmatprep.subr.bf16.mxu0 0
    %138 = vmatpush1.bf16.msra.mxu0 0
    %139 = vmatprep.subr.bf16.mxu0 0
    %140 = vmatpush1.bf16.msra.mxu0 0
    %141 = vmatprep.subr.bf16.mxu0 0
    %142 = vmatpush1.bf16.msra.mxu0 0
    %143 = vmatprep.subr.bf16.mxu0 0
    %144 = vmatpush1.bf16.msra.mxu0 0
    %145 = vmatprep.mubr.bf16.mxu0 0
    %146 = vmatmul.mubr.bf16.gmra.mrb[0].mxu0 %v48
    %v147 = vpop.f32.mrb[0].mxu0
    %v148 = vadd.f32 0.0, %v147
    %v149 = vpop.f32.mrb[0].mxu0
    %v150 = vpop.f32.mrb[0].mxu0
    %v151 = vpop.f32.mrb[0].mxu0
    %152 = vdwg.mxu0
    %v153 = vadd.f32 %v47, %v148
    %154 = vst [vmem:[#allocation7] sm:$0xff] %v153
    // Predicated region
    $region26: #{tpu_custom_call.1} parent=1 // pred_check
      %p155 = pneg %p42
    $region27: #{tpu_custom_call.1} parent=1 // pred_check_branch
      %157 = sbr.rel (%p155) target = $region29
    $region28: #{tpu_custom_call.1} parent=1 // pred_region
      %v158 = vld [vmem:[#allocation7] sm:$0xff]
      %v159 = vmul.f32 %v158, 0.25
      %v160 = vld [vmem:[%s2] sm:$0x1]
      %v162 = vlaneseq
      %v163 = vshrl.u32 %v162, 7
      %v164 = vsub.s32 0, %v163
      %v165 = vrot.slane %v160, %v164
      %v167 = vadd.f32 %v159, %v165
      %168 = vst [vmem:[#allocation7] sm:$0xff] %v167
    $region29: #{tpu_custom_call.1} parent=1 // pred_fallthru
      _
    // Predicated region
    $region30: #{tpu_custom_call.1} parent=1 // pred_check
      _
    $region31: #{tpu_custom_call.1} parent=1 // pred_check_branch
      %170 = sbr.rel (0) target = $region33
    $region32: #{tpu_custom_call.1} parent=1 // pred_region
      %s172 = ssub.s32 128, 128
      %173 = vsyncadd [#allocation4], %s172
      %s175 = sshll.u32 [#allocation7], 4
      %s176 = int_to_ptr.vmem [resolvable:$true] %s175
      %178 = dma.vmem_to_hbm [thread:$0]  %s176, 128, %s3, [#allocation4]
    $region33: #{tpu_custom_call.1} parent=1 // pred_fallthru
      _
    // Predicated region
    $region34: #{tpu_custom_call.1} parent=1 // pred_check
      _
    $region35: #{tpu_custom_call.1} parent=1 // pred_check_branch
      %180 = sbr.rel (0) target = $region37
    $region36: #{tpu_custom_call.1} parent=1 // pred_region
      %181 = dma.done [#allocation4], 128
    $region37: #{tpu_custom_call.1} parent=1 // pred_fallthru
      _
    %182 = vsyncpa [#allocation3], 1
    %183 = vsyncpa [#allocation6], 1
    %184 = vsyncpa [#allocation4], 1

</llo_original>
